<compile_context>
chip_gen: v7x
topology: tpu7x:2x2x1
jax: 0.10.0
libtpu: 0.0.40
codegen_flags: <defaults>
</compile_context>

<pallas_src>
import functools

import jax
import jax.numpy as jnp
from jax.experimental import pallas as pl
from jax.experimental.pallas import tpu as pltpu

# Per-step element budget for ONE input block (elements, not bytes, so the f32
# temporaries inside the kernel are bounded regardless of input dtype).
_BLOCK_BUDGET_ELEMS = 1 << 20  # ~4 MiB of f32 per big temporary


def _round_up(x, m):
    return ((x + m - 1) // m) * m


def _round_down(x, m):
    return (x // m) * m


def _row_align(dtype):
    bits = jnp.dtype(dtype).itemsize * 8
    if bits >= 32:
        return 8
    if bits == 16:
        return 16
    return 32


def _choose_tiles(R, N, row_align, budget_elems):
    """Pick (row_block, col_chunk).

    col_chunk is either the full spatial extent N (single reduction step) or a
    lane-aligned (multiple-of-128) chunk that need not divide N (the kernel
    masks the tail).  VMEM footprint is accounted with lane padding to 128.
    """
    r_full = _round_up(R, row_align)
    n_pad = _round_up(N, 128)  # VMEM lane padding of a full-N block
    if n_pad * row_align <= budget_elems:
        # Whole spatial extent per step; grow rows per step to amortize the
        # per-grid-step overhead.
        nc = N
        rblk = _round_down(budget_elems // n_pad, row_align)
        rblk = max(row_align, min(rblk, r_full))
    else:
        # Need a spatial reduction axis: minimal rows, big lane-dense chunks.
        rblk = row_align
        cap = max(128, _round_down(budget_elems // row_align, 128))
        nc = min(n_pad, cap)
    return rblk, nc


def _cc_kernel(gt_ref, pr_ref, out_ref, s_g, s_p, s_gp, s_gg, s_pp,
               *, inv_n, n_total, nc, mask_tail):
    """Grid = (row_blocks, spatial_chunks); axis 1 is the reduction axis."""
    k = pl.program_id(1)

    @pl.when(k == 0)
    def _init():
        s_g[...] = jnp.zeros_like(s_g)
        s_p[...] = jnp.zeros_like(s_p)
        s_gp[...] = jnp.zeros_like(s_gp)
        s_gg[...] = jnp.zeros_like(s_gg)
        s_pp[...] = jnp.zeros_like(s_pp)

    gt = gt_ref[...].astype(jnp.float32)
    pr = pr_ref[...].astype(jnp.float32)

    if mask_tail:
        # The last spatial chunk overhangs the array; out-of-bounds reads are
        # unspecified, so zero them with a select (NOT a multiply: garbage bits
        # may decode to NaN/Inf).
        col = k * nc + jax.lax.broadcasted_iota(jnp.int32, gt.shape, 1)
        valid = col < n_total
        gt = jnp.where(valid, gt, 0.0)
        pr = jnp.where(valid, pr, 0.0)

    # Lane reductions (XLU) per row; accumulate running sums in f32.
    s_g[...] += jnp.sum(gt, axis=-1, keepdims=True)
    s_p[...] += jnp.sum(pr, axis=-1, keepdims=True)
    s_gp[...] += jnp.sum(gt * pr, axis=-1, keepdims=True)
    s_gg[...] += jnp.sum(gt * gt, axis=-1, keepdims=True)
    s_pp[...] += jnp.sum(pr * pr, axis=-1, keepdims=True)

    @pl.when(k == pl.num_programs(1) - 1)
    def _finalize():
        inv = jnp.float32(inv_n)  # 1 / (H * W), the FULL plane size
        mu_g = s_g[...] * inv
        mu_p = s_p[...] * inv
        cor = s_gp[...] * inv - mu_g * mu_p
        var_g = s_gg[...] * inv - mu_g * mu_g
        var_p = s_pp[...] * inv - mu_p * mu_p
        # cor / sqrt(var_g * var_p); rsqrt lands on the otherwise-idle EUP slot.
        out_ref[...] = (cor * jax.lax.rsqrt(var_g * var_p)).astype(out_ref.dtype)


def cc_per_channel_pallas(gt, pred, *, budget_elems=_BLOCK_BUDGET_ELEMS):
    """Returns the (B, C) per-(batch, channel) correlation coefficients."""
    assert gt.shape == pred.shape
    B, C, H, W = gt.shape
    R = B * C
    N = H * W

    row_align = _row_align(gt.dtype)
    rblk, nc = _choose_tiles(R, N, row_align, budget_elems)

    # Free reshape for contiguous NCHW; no pre-cast, no padding copies.
    gt2 = gt.reshape(R, N)
    pr2 = pred.reshape(R, N)

    grid_rows = pl.cdiv(R, rblk)
    grid_cols = pl.cdiv(N, nc)
    r_out = grid_rows * rblk  # output rounded up so its blocks divide evenly
    mask_tail = (N % nc) != 0

    itemsize = jnp.dtype(gt.dtype).itemsize
    nc_pad = _round_up(nc, 128)
    in_block_bytes = rblk * nc_pad * itemsize  # per input, per pipeline buffer
    f32_block_bytes = rblk * nc_pad * 4        # in-kernel f32 temporaries
    # 2 inputs x 2 pipeline buffers + ~5 live f32 temporaries + headroom.
    vmem_limit = 4 * in_block_bytes + 5 * f32_block_bytes + (4 << 20)
    vmem_limit = int(min(max(vmem_limit, 32 << 20), 56 << 20))

    out = pl.pallas_call(
        functools.partial(_cc_kernel, inv_n=1.0 / float(N), n_total=N, nc=nc,
                          mask_tail=mask_tail),
        out_shape=jax.ShapeDtypeStruct((r_out, 1), jnp.float32),
        grid=(grid_rows, grid_cols),
        in_specs=[
            pl.BlockSpec((rblk, nc), lambda i, k: (i, k)),
            pl.BlockSpec((rblk, nc), lambda i, k: (i, k)),
        ],
        out_specs=pl.BlockSpec((rblk, 1), lambda i, k: (i, 0)),
        scratch_shapes=[pltpu.VMEM((rblk, 1), jnp.float32)] * 5,
        compiler_params=pltpu.CompilerParams(
            dimension_semantics=("parallel", "arbitrary"),
            vmem_limit_bytes=vmem_limit,
        ),
    )(gt2, pr2)

    return out[:R, 0].reshape(B, C)


def correlation_coefficient(gt, pred, is_reduce_channel=True):
    """Pallas equivalent of CorrelationCoefficient.forward (BCHW inputs)."""
    cc_bc = cc_per_channel_pallas(gt, pred)  # (B, C) float32
    if is_reduce_channel:
        return jnp.mean(cc_bc)          # scalar, matches cc_per_channel.mean()
    else:
        return jnp.mean(cc_bc, axis=0)  # (C,), matches cc_per_channel.mean(0)


def _reference(gt, pred, is_reduce_channel=True):
    gt = gt.astype(jnp.float32)
    pred = pred.astype(jnp.float32)
    mu_gt = jnp.mean(gt, axis=(-2, -1))
    mu_pred = jnp.mean(pred, axis=(-2, -1))
    mu_gp = jnp.mean(gt * pred, axis=(-2, -1))
    cor = mu_gp - mu_gt * mu_pred
    var_gt = jnp.mean(gt * gt, axis=(-2, -1)) - mu_gt * mu_gt
    var_pred = jnp.mean(pred * pred, axis=(-2, -1)) - mu_pred * mu_pred
    cc = cor / jnp.sqrt(var_gt * var_pred)
    return jnp.mean(cc) if is_reduce_channel else jnp.mean(cc, axis=0)


if __name__ == "__main__":
    key = jax.random.PRNGKey(0)
    ok = True

    # Primary test shape (module-consistent small BCHW).
    k_gt, k_pr = jax.random.split(key)
    B, C, H, W = 2, 4, 16, 16
    gt = jax.random.uniform(k_gt, (B, C, H, W), dtype=jnp.float32)
    pred = 0.7 * gt + 0.3 * jax.random.uniform(k_pr, (B, C, H, W), dtype=jnp.float32)

    out_reduced = jax.block_until_ready(correlation_coefficient(gt, pred, True))
    out_per_ch = jax.block_until_ready(correlation_coefficient(gt, pred, False))
    ref_reduced = _reference(gt, pred, True)
    ref_per_ch = _reference(gt, pred, False)

    ok &= out_reduced.shape == ()
    ok &= out_per_ch.shape == (C,)
    ok &= bool(jnp.allclose(out_reduced, ref_reduced, atol=1e-5, rtol=1e-5))
    ok &= bool(jnp.allclose(out_per_ch, ref_per_ch, atol=1e-5, rtol=1e-5))

    # Secondary shape: non-square spatial, R not a multiple of 8 (row overhang).
    k2a, k2b = jax.random.split(jax.random.PRNGKey(1))
    gt2 = jax.random.uniform(k2a, (2, 3, 8, 24), dtype=jnp.float32)
    pred2 = 0.5 * gt2 + 0.5 * jax.random.uniform(k2b, (2, 3, 8, 24), dtype=jnp.float32)
    out2 = jax.block_until_ready(correlation_coefficient(gt2, pred2, False))
    ref2 = _reference(gt2, pred2, False)
    ok &= out2.shape == (3,)
    ok &= bool(jnp.allclose(out2, ref2, atol=1e-5, rtol=1e-5))

    # Third: force the spatial-chunking + tail-mask path with a tiny budget
    # (N = 720 is not a multiple of 128, so the last chunk is masked in-kernel).
    k3a, k3b = jax.random.split(jax.random.PRNGKey(2))
    gt3 = jax.random.uniform(k3a, (1, 2, 12, 60), dtype=jnp.float32)
    pred3 = 0.6 * gt3 + 0.4 * jax.random.uniform(k3b, (1, 2, 12, 60), dtype=jnp.float32)
    out3 = jnp.mean(cc_per_channel_pallas(gt3, pred3, budget_elems=1024))
    out3 = jax.block_until_ready(out3)
    ref3 = _reference(gt3, pred3, True)
    ok &= bool(jnp.allclose(out3, ref3, atol=1e-5, rtol=1e-5))

    # Fourth: bf16 inputs (exercises the 16-row sublane alignment + f32 accum).
    gt4 = gt.astype(jnp.bfloat16)
    pred4 = pred.astype(jnp.bfloat16)
    out4 = jax.block_until_ready(correlation_coefficient(gt4, pred4, True))
    ref4 = _reference(gt4, pred4, True)
    ok &= bool(jnp.allclose(out4, ref4, atol=1e-3, rtol=1e-3))

    assert ok
    print("KERNEL_OK")
</pallas_src>

<mosaic_0001>
module attributes {stable_mosaic.version = 11 : i64} {
  func.func @_cc_kernel(%arg0: i32, %arg1: i32, %arg2: memref<8x256xf32, #tpu.memory_space<vmem>>, %arg3: memref<8x256xf32, #tpu.memory_space<vmem>>, %arg4: memref<8x1xf32, #tpu.memory_space<vmem>>, %arg5: memref<8x1xf32, #tpu.memory_space<vmem>>, %arg6: memref<8x1xf32, #tpu.memory_space<vmem>>, %arg7: memref<8x1xf32, #tpu.memory_space<vmem>>, %arg8: memref<8x1xf32, #tpu.memory_space<vmem>>, %arg9: memref<8x1xf32, #tpu.memory_space<vmem>>) attributes {dimension_semantics = [#tpu.dimension_semantics<parallel>, #tpu.dimension_semantics<arbitrary>], iteration_bounds = array<i64: 1, 1>, scalar_prefetch = 0 : i64, scratch_operands = 5 : i64, tpu.core_type = #tpu.core_type<tc>, window_params = [{transform_indices = @transform_0, window_bounds = array<i64: 8, 256>}, {transform_indices = @transform_1, window_bounds = array<i64: 8, 256>}, {transform_indices = @transform_2, window_bounds = array<i64: 8, 1>}]} {
    %c0_i32 = arith.constant 0 : i32
    %0 = arith.cmpi eq, %arg1, %c0_i32 : i32
    %1 = arith.extui %0 : i1 to i32
    %c0_i32_0 = arith.constant 0 : i32
    %2 = arith.cmpi ne, %1, %c0_i32_0 : i32
    scf.if %2 {
      %cst_30 = arith.constant 0.000000e+00 : f32
      %36 = vector.broadcast %cst_30 : f32 to vector<8x1xf32>
      %c0_31 = arith.constant 0 : index
      %c0_32 = arith.constant 0 : index
      %37 = vector.load %arg5[%c0_31, %c0_32] : memref<8x1xf32, #tpu.memory_space<vmem>>, vector<8x1xf32>
      tpu.vector_store %arg5[%c0_31, %c0_32], %36 {strides = array<i32>} : memref<8x1xf32, #tpu.memory_space<vmem>>, vector<8x1xf32>,
      %cst_33 = arith.constant 0.000000e+00 : f32
      %38 = vector.broadcast %cst_33 : f32 to vector<8x1xf32>
      %c0_34 = arith.constant 0 : index
      %c0_35 = arith.constant 0 : index
      %39 = vector.load %arg6[%c0_34, %c0_35] : memref<8x1xf32, #tpu.memory_space<vmem>>, vector<8x1xf32>
      tpu.vector_store %arg6[%c0_34, %c0_35], %38 {strides = array<i32>} : memref<8x1xf32, #tpu.memory_space<vmem>>, vector<8x1xf32>,
      %cst_36 = arith.constant 0.000000e+00 : f32
      %40 = vector.broadcast %cst_36 : f32 to vector<8x1xf32>
      %c0_37 = arith.constant 0 : index
      %c0_38 = arith.constant 0 : index
      %41 = vector.load %arg7[%c0_37, %c0_38] : memref<8x1xf32, #tpu.memory_space<vmem>>, vector<8x1xf32>
      tpu.vector_store %arg7[%c0_37, %c0_38], %40 {strides = array<i32>} : memref<8x1xf32, #tpu.memory_space<vmem>>, vector<8x1xf32>,
      %cst_39 = arith.constant 0.000000e+00 : f32
      %42 = vector.broadcast %cst_39 : f32 to vector<8x1xf32>
      %c0_40 = arith.constant 0 : index
      %c0_41 = arith.constant 0 : index
      %43 = vector.load %arg8[%c0_40, %c0_41] : memref<8x1xf32, #tpu.memory_space<vmem>>, vector<8x1xf32>
      tpu.vector_store %arg8[%c0_40, %c0_41], %42 {strides = array<i32>} : memref<8x1xf32, #tpu.memory_space<vmem>>, vector<8x1xf32>,
      %cst_42 = arith.constant 0.000000e+00 : f32
      %44 = vector.broadcast %cst_42 : f32 to vector<8x1xf32>
      %c0_43 = arith.constant 0 : index
      %c0_44 = arith.constant 0 : index
      %45 = vector.load %arg9[%c0_43, %c0_44] : memref<8x1xf32, #tpu.memory_space<vmem>>, vector<8x1xf32>
      tpu.vector_store %arg9[%c0_43, %c0_44], %44 {strides = array<i32>} : memref<8x1xf32, #tpu.memory_space<vmem>>, vector<8x1xf32>,
    } else {
    }
    %c0 = arith.constant 0 : index
    %c0_1 = arith.constant 0 : index
    %3 = vector.load %arg2[%c0, %c0_1] : memref<8x256xf32, #tpu.memory_space<vmem>>, vector<8x256xf32>
    %c0_2 = arith.constant 0 : index
    %c0_3 = arith.constant 0 : index
    %4 = vector.load %arg3[%c0_2, %c0_3] : memref<8x256xf32, #tpu.memory_space<vmem>>, vector<8x256xf32>
    %c0_4 = arith.constant 0 : index
    %c0_5 = arith.constant 0 : index
    %5 = vector.load %arg5[%c0_4, %c0_5] : memref<8x1xf32, #tpu.memory_space<vmem>>, vector<8x1xf32>
    %cst = arith.constant dense<0.000000e+00> : vector<8xf32>
    %6 = vector.multi_reduction <add>, %3, %cst [1] : vector<8x256xf32> to vector<8xf32>
    %7 = vector.shape_cast %6 : vector<8xf32> to vector<8x1xf32>
    %8 = arith.addf %5, %7 : vector<8x1xf32>
    %c0_6 = arith.constant 0 : index
    %c0_7 = arith.constant 0 : index
    %9 = vector.load %arg5[%c0_6, %c0_7] : memref<8x1xf32, #tpu.memory_space<vmem>>, vector<8x1xf32>
    tpu.vector_store %arg5[%c0_6, %c0_7], %8 {strides = array<i32>} : memref<8x1xf32, #tpu.memory_space<vmem>>, vector<8x1xf32>,
    %c0_8 = arith.constant 0 : index
    %c0_9 = arith.constant 0 : index
    %10 = vector.load %arg6[%c0_8, %c0_9] : memref<8x1xf32, #tpu.memory_space<vmem>>, vector<8x1xf32>
    %cst_10 = arith.constant dense<0.000000e+00> : vector<8xf32>
    %11 = vector.multi_reduction <add>, %4, %cst_10 [1] : vector<8x256xf32> to vector<8xf32>
    %12 = vector.shape_cast %11 : vector<8xf32> to vector<8x1xf32>
    %13 = arith.addf %10, %12 : vector<8x1xf32>
    %c0_11 = arith.constant 0 : index
    %c0_12 = arith.constant 0 : index
    %14 = vector.load %arg6[%c0_11, %c0_12] : memref<8x1xf32, #tpu.memory_space<vmem>>, vector<8x1xf32>
    tpu.vector_store %arg6[%c0_11, %c0_12], %13 {strides = array<i32>} : memref<8x1xf32, #tpu.memory_space<vmem>>, vector<8x1xf32>,
    %c0_13 = arith.constant 0 : index
    %c0_14 = arith.constant 0 : index
    %15 = vector.load %arg7[%c0_13, %c0_14] : memref<8x1xf32, #tpu.memory_space<vmem>>, vector<8x1xf32>
    %16 = arith.mulf %3, %4 : vector<8x256xf32>
    %cst_15 = arith.constant dense<0.000000e+00> : vector<8xf32>
    %17 = vector.multi_reduction <add>, %16, %cst_15 [1] : vector<8x256xf32> to vector<8xf32>
    %18 = vector.shape_cast %17 : vector<8xf32> to vector<8x1xf32>
    %19 = arith.addf %15, %18 : vector<8x1xf32>
    %c0_16 = arith.constant 0 : index
    %c0_17 = arith.constant 0 : index
    %20 = vector.load %arg7[%c0_16, %c0_17] : memref<8x1xf32, #tpu.memory_space<vmem>>, vector<8x1xf32>
    tpu.vector_store %arg7[%c0_16, %c0_17], %19 {strides = array<i32>} : memref<8x1xf32, #tpu.memory_space<vmem>>, vector<8x1xf32>,
    %c0_18 = arith.constant 0 : index
    %c0_19 = arith.constant 0 : index
    %21 = vector.load %arg8[%c0_18, %c0_19] : memref<8x1xf32, #tpu.memory_space<vmem>>, vector<8x1xf32>
    %22 = arith.mulf %3, %3 : vector<8x256xf32>
    %cst_20 = arith.constant dense<0.000000e+00> : vector<8xf32>
    %23 = vector.multi_reduction <add>, %22, %cst_20 [1] : vector<8x256xf32> to vector<8xf32>
    %24 = vector.shape_cast %23 : vector<8xf32> to vector<8x1xf32>
    %25 = arith.addf %21, %24 : vector<8x1xf32>
    %c0_21 = arith.constant 0 : index
    %c0_22 = arith.constant 0 : index
    %26 = vector.load %arg8[%c0_21, %c0_22] : memref<8x1xf32, #tpu.memory_space<vmem>>, vector<8x1xf32>
    tpu.vector_store %arg8[%c0_21, %c0_22], %25 {strides = array<i32>} : memref<8x1xf32, #tpu.memory_space<vmem>>, vector<8x1xf32>,
    %c0_23 = arith.constant 0 : index
    %c0_24 = arith.constant 0 : index
    %27 = vector.load %arg9[%c0_23, %c0_24] : memref<8x1xf32, #tpu.memory_space<vmem>>, vector<8x1xf32>
    %28 = arith.mulf %4, %4 : vector<8x256xf32>
    %cst_25 = arith.constant dense<0.000000e+00> : vector<8xf32>
    %29 = vector.multi_reduction <add>, %28, %cst_25 [1] : vector<8x256xf32> to vector<8xf32>
    %30 = vector.shape_cast %29 : vector<8xf32> to vector<8x1xf32>
    %31 = arith.addf %27, %30 : vector<8x1xf32>
    %c0_26 = arith.constant 0 : index
    %c0_27 = arith.constant 0 : index
    %32 = vector.load %arg9[%c0_26, %c0_27] : memref<8x1xf32, #tpu.memory_space<vmem>>, vector<8x1xf32>
    tpu.vector_store %arg9[%c0_26, %c0_27], %31 {strides = array<i32>} : memref<8x1xf32, #tpu.memory_space<vmem>>, vector<8x1xf32>,
    %c0_i32_28 = arith.constant 0 : i32
    %33 = arith.cmpi eq, %arg1, %c0_i32_28 : i32
    %34 = arith.extui %33 : i1 to i32
    %c0_i32_29 = arith.constant 0 : i32
    %35 = arith.cmpi ne, %34, %c0_i32_29 : i32
    scf.if %35 {
      %c0_30 = arith.constant 0 : index
      %c0_31 = arith.constant 0 : index
      %36 = vector.load %arg5[%c0_30, %c0_31] : memref<8x1xf32, #tpu.memory_space<vmem>>, vector<8x1xf32>
      %cst_32 = arith.constant 3.906250e-03 : f32
      %37 = vector.broadcast %cst_32 : f32 to vector<8x1xf32>
      %38 = arith.mulf %36, %37 : vector<8x1xf32>
      %c0_33 = arith.constant 0 : index
      %c0_34 = arith.constant 0 : index
      %39 = vector.load %arg6[%c0_33, %c0_34] : memref<8x1xf32, #tpu.memory_space<vmem>>, vector<8x1xf32>
      %cst_35 = arith.constant 3.906250e-03 : f32
      %40 = vector.broadcast %cst_35 : f32 to vector<8x1xf32>
      %41 = arith.mulf %39, %40 : vector<8x1xf32>
      %c0_36 = arith.constant 0 : index
      %c0_37 = arith.constant 0 : index
      %42 = vector.load %arg7[%c0_36, %c0_37] : memref<8x1xf32, #tpu.memory_space<vmem>>, vector<8x1xf32>
      %cst_38 = arith.constant 3.906250e-03 : f32
      %43 = vector.broadcast %cst_38 : f32 to vector<8x1xf32>
      %44 = arith.mulf %42, %43 : vector<8x1xf32>
      %45 = arith.mulf %38, %41 : vector<8x1xf32>
      %46 = arith.subf %44, %45 : vector<8x1xf32>
      %c0_39 = arith.constant 0 : index
      %c0_40 = arith.constant 0 : index
      %47 = vector.load %arg8[%c0_39, %c0_40] : memref<8x1xf32, #tpu.memory_space<vmem>>, vector<8x1xf32>
      %cst_41 = arith.constant 3.906250e-03 : f32
      %48 = vector.broadcast %cst_41 : f32 to vector<8x1xf32>
      %49 = arith.mulf %47, %48 : vector<8x1xf32>
      %50 = arith.mulf %38, %38 : vector<8x1xf32>
      %51 = arith.subf %49, %50 : vector<8x1xf32>
      %c0_42 = arith.constant 0 : index
      %c0_43 = arith.constant 0 : index
      %52 = vector.load %arg9[%c0_42, %c0_43] : memref<8x1xf32, #tpu.memory_space<vmem>>, vector<8x1xf32>
      %cst_44 = arith.constant 3.906250e-03 : f32
      %53 = vector.broadcast %cst_44 : f32 to vector<8x1xf32>
      %54 = arith.mulf %52, %53 : vector<8x1xf32>
      %55 = arith.mulf %41, %41 : vector<8x1xf32>
      %56 = arith.subf %54, %55 : vector<8x1xf32>
      %57 = arith.mulf %51, %56 : vector<8x1xf32>
      %58 = math.rsqrt %57 : vector<8x1xf32>
      %59 = arith.mulf %46, %58 : vector<8x1xf32>
      %c0_45 = arith.constant 0 : index
      %c0_46 = arith.constant 0 : index
      %60 = vector.load %arg4[%c0_45, %c0_46] : memref<8x1xf32, #tpu.memory_space<vmem>>, vector<8x1xf32>
      tpu.vector_store %arg4[%c0_45, %c0_46], %59 {strides = array<i32>} : memref<8x1xf32, #tpu.memory_space<vmem>>, vector<8x1xf32>,
    } else {
    }
    return
  }
  func.func @transform_0(%arg0: i32, %arg1: i32) -> (i32, i32) {
    %c0_i32 = arith.constant 0 : i32
    return %arg0, %arg1 : i32, i32
  }
  func.func @transform_1(%arg0: i32, %arg1: i32) -> (i32, i32) {
    %c0_i32 = arith.constant 0 : i32
    return %arg0, %arg1 : i32, i32
  }
  func.func @transform_2(%arg0: i32, %arg1: i32) -> (i32, i32) {
    %c0_i32 = arith.constant 0 : i32
    %c0_i32_0 = arith.constant 0 : i32
    return %arg0, %c0_i32 : i32, i32
  }
}

</mosaic_0001>

<llo_original>
// kernel: tpu_custom_call.1
$region0: #{tpu_custom_call.1}
  #allocation0 [shape = 'u32[]', space=smem, size = 0x4, offset = 0x4, fixed_abs, tag = 'smem constant byte address 0x4 - core index']
  #allocation1 [shape = 'u32[144,128]{1,0:T(1,128)}', space=vmem, size = 0x12000, scoped, tag = 'internal scratch']
  #allocation2 [shape = 'f32[8,1]{1,0:T(8,128)}', space=vmem, size = 0x1000, scoped, tag = 'scratch operand']
  #allocation3 [shape = 'f32[8,1]{1,0:T(8,128)}', space=vmem, size = 0x1000, scoped, tag = 'scratch operand']
  #allocation4 [shape = 'f32[8,1]{1,0:T(8,128)}', space=vmem, size = 0x1000, scoped, tag = 'scratch operand']
  #allocation5 [shape = 'f32[8,1]{1,0:T(8,128)}', space=vmem, size = 0x1000, scoped, tag = 'scratch operand']
  #allocation6 [shape = 'f32[8,1]{1,0:T(8,128)}', space=vmem, size = 0x1000, scoped, tag = 'scratch operand']
  %s0 = inlined_call_operand.hbm [shape: f32[8,256], index: 0, kind: input, shape index: {}]
  %s1 = inlined_call_operand.hbm [shape: f32[8,256], index: 1, kind: input, shape index: {}]
  %s2 = inlined_call_operand.vmem [shape: f32[8,1], index: 2, kind: output, shape index: {}]
  %s3 = sld [smem:[#allocation0]]
  $region34: #{tpu_custom_call.1} parent=0
    _
  %s5 = ssub.s32 1, %s3
  %s6 = scalar_select 0, %s5, %s3
  $region1: #{tpu_custom_call.1} parent=0
    #allocation7 [shape = 'u8[8192]{0}', space=vmem, size = 0x2000, scoped, tag = 'input window, operand 0, single buffered']
    #allocation8 [shape = 's32[1]{0}', space=sflag, size = 0x4, scoped, tag = 'scoped memory for tpu_custom_call.1']
    #allocation9 [shape = 'u8[8192]{0}', space=vmem, size = 0x2000, scoped, tag = 'input window, operand 1, single buffered']
    #allocation10 [shape = 's32[1]{0}', space=sflag, size = 0x4, scoped, tag = 'scoped memory for tpu_custom_call.1']
    %7 = vsyncpa [#allocation8], 0
    %8 = vsyncpa [#allocation10], 0
    // Predicated region
    $region2: #{tpu_custom_call.1} parent=1 // pred_check
      _
    $region3: #{tpu_custom_call.1} parent=1 // pred_check_branch
      %10 = sbr.rel (0) target = $region5
    $region4: #{tpu_custom_call.1} parent=1 // pred_region
      %s12 = ssub.s32 256, 256
      %13 = vsyncadd [#allocation8], %s12
      %s15 = sshll.u32 [#allocation7], 4
      %s16 = int_to_ptr.vmem [resolvable:$true] %s15
      %18 = dma.hbm_to_vmem [thread:$0]  %s0, 256, %s16, [#allocation8]
    $region5: #{tpu_custom_call.1} parent=1 // pred_fallthru
      _
    // Predicated region
    $region6: #{tpu_custom_call.1} parent=1 // pred_check
      _
    $region7: #{tpu_custom_call.1} parent=1 // pred_check_branch
      %20 = sbr.rel (0) target = $region9
    $region8: #{tpu_custom_call.1} parent=1 // pred_region
      %s22 = ssub.s32 256, 256
      %23 = vsyncadd [#allocation10], %s22
      %s25 = sshll.u32 [#allocation9], 4
      %s26 = int_to_ptr.vmem [resolvable:$true] %s25
      %28 = dma.hbm_to_vmem [thread:$0]  %s1, 256, %s26, [#allocation10]
    $region9: #{tpu_custom_call.1} parent=1 // pred_fallthru
      _
    // Predicated region
    $region10: #{tpu_custom_call.1} parent=1 // pred_check
      _
    $region11: #{tpu_custom_call.1} parent=1 // pred_check_branch
      %30 = sbr.rel (0) target = $region13
    $region12: #{tpu_custom_call.1} parent=1 // pred_region
      %31 = dma.done [#allocation8], 256
    $region13: #{tpu_custom_call.1} parent=1 // pred_fallthru
      _
    // Predicated region
    $region14: #{tpu_custom_call.1} parent=1 // pred_check
      _
    $region15: #{tpu_custom_call.1} parent=1 // pred_check_branch
      %33 = sbr.rel (0) target = $region17
    $region16: #{tpu_custom_call.1} parent=1 // pred_region
      %34 = dma.done [#allocation10], 256
    $region17: #{tpu_custom_call.1} parent=1 // pred_fallthru
      _
    %p35 = scmp.eq.s32.totalorder 0, 0
    // Predicated region
    $region18: #{tpu_custom_call.1} parent=1 // pred_check
      %p36 = pneg %p35
    $region19: #{tpu_custom_call.1} parent=1 // pred_check_branch
      %38 = sbr.rel (%p36) target = $region21
    $region20: #{tpu_custom_call.1} parent=1 // pred_region
      %vm39 = vcmask 7168
      %40 = vst.msk [vmem:[#allocation2] sm:$0xff] %vm39, 0.0
      %41 = vst.msk [vmem:[#allocation3] sm:$0xff] %vm39, 0.0
      %42 = vst.msk [vmem:[#allocation4] sm:$0xff] %vm39, 0.0
      %43 = vst.msk [vmem:[#allocation5] sm:$0xff] %vm39, 0.0
      %44 = vst.msk [vmem:[#allocation6] sm:$0xff] %vm39, 0.0
    $region21: #{tpu_custom_call.1} parent=1 // pred_fallthru
      _
    %v45 = vld [vmem:[#allocation7] sm:$0xff]
    %v46 = vld [vmem:[#allocation7 + $0x8] sm:$0xff]
    %v47 = vld [vmem:[#allocation9] sm:$0xff]
    %v48 = vld [vmem:[#allocation9 + $0x8] sm:$0xff]
    %v49 = vld [vmem:[#allocation2] sm:$0xff]
    %v50 = vadd.f32 %v45, %v46
    %51 = vadd.xlane.f32.xlu0 %v50
    %v52 = vpop.xlane.xlu0 %51
    %v53 = vadd.f32 %v49, %v52
    %vm54 = vcmask 7168
    %55 = vst.msk [vmem:[#allocation2] sm:$0xff] %vm54, %v53
    %v56 = vld [vmem:[#allocation3] sm:$0xff]
    %v57 = vadd.f32 %v47, %v48
    %58 = vadd.xlane.f32.xlu0 %v57
    %v59 = vpop.xlane.xlu0 %58
    %v60 = vadd.f32 %v56, %v59
    %61 = vst.msk [vmem:[#allocation3] sm:$0xff] %vm54, %v60
    %v62 = vld [vmem:[#allocation4] sm:$0xff]
    %v63 = vmul.f32 %v45, %v47
    %v64 = vmul.f32 %v46, %v48
    %v65 = vadd.f32 %v63, %v64
    %66 = vadd.xlane.f32.xlu0 %v65
    %v67 = vpop.xlane.xlu0 %66
    %v68 = vadd.f32 %v62, %v67
    %69 = vst.msk [vmem:[#allocation4] sm:$0xff] %vm54, %v68
    %v70 = vld [vmem:[#allocation5] sm:$0xff]
    %v71 = vmul.f32 %v45, %v45
    %v72 = vmul.f32 %v46, %v46
    %v73 = vadd.f32 %v71, %v72
    %74 = vadd.xlane.f32.xlu0 %v73
    %v75 = vpop.xlane.xlu0 %74
    %v76 = vadd.f32 %v70, %v75
    %77 = vst.msk [vmem:[#allocation5] sm:$0xff] %vm54, %v76
    %v78 = vld [vmem:[#allocation6] sm:$0xff]
    %v79 = vmul.f32 %v47, %v47
    %v80 = vmul.f32 %v48, %v48
    %v81 = vadd.f32 %v79, %v80
    %82 = vadd.xlane.f32.xlu0 %v81
    %v83 = vpop.xlane.xlu0 %82
    %v84 = vadd.f32 %v78, %v83
    %85 = vst.msk [vmem:[#allocation6] sm:$0xff] %vm54, %v84
    // Predicated region
    $region22: #{tpu_custom_call.1} parent=1 // pred_check
      %p86 = pneg %p35
    $region23: #{tpu_custom_call.1} parent=1 // pred_check_branch
      %88 = sbr.rel (%p86) target = $region25
    $region24: #{tpu_custom_call.1} parent=1 // pred_region
      %v89 = vld [vmem:[#allocation2] sm:$0xff]
      %v90 = vmul.f32 %v89, 0.00390625
      %v91 = vld [vmem:[#allocation3] sm:$0xff]
      %v92 = vmul.f32 %v91, 0.00390625
      %v93 = vld [vmem:[#allocation4] sm:$0xff]
      %v94 = vmul.f32 %v93, 0.00390625
      %v95 = vmul.f32 %v90, %v92
      %v96 = vsub.f32 %v94, %v95
      %v97 = vld [vmem:[#allocation5] sm:$0xff]
      %v98 = vmul.f32 %v97, 0.00390625
      %v99 = vmul.f32 %v90, %v90
      %v100 = vsub.f32 %v98, %v99
      %v101 = vld [vmem:[#allocation6] sm:$0xff]
      %v102 = vmul.f32 %v101, 0.00390625
      %v103 = vmul.f32 %v92, %v92
      %v104 = vsub.f32 %v102, %v103
      %v105 = vmul.f32 %v100, %v104
      %v106 = vrsqrt.pop %v105
      %v107 = vmul.f32 %v96, %v106
      %108 = vst.msk [vmem:[%s2] sm:$0xff] %vm54, %v107
    $region25: #{tpu_custom_call.1} parent=1 // pred_fallthru
      _
    // Predicated region
    $region26: #{tpu_custom_call.1} parent=1 // pred_check
      _
    $region27: #{tpu_custom_call.1} parent=1 // pred_check_branch
      %110 = sbr.rel (0) target = $region29
    $region28: #{tpu_custom_call.1} parent=1 // pred_region
      _
    $region29: #{tpu_custom_call.1} parent=1 // pred_fallthru
      _
    // Predicated region
    $region30: #{tpu_custom_call.1} parent=1 // pred_check
      _
    $region31: #{tpu_custom_call.1} parent=1 // pred_check_branch
      %112 = sbr.rel (0) target = $region33
    $region32: #{tpu_custom_call.1} parent=1 // pred_region
      _
    $region33: #{tpu_custom_call.1} parent=1 // pred_fallthru
      _
    %113 = vsyncpa [#allocation8], 1
    %114 = vsyncpa [#allocation10], 1

</llo_original>
